<compile_context>
chip_gen: v5e
topology: v5e:2x2
jax: 0.10.0
libtpu: 0.0.40
codegen_flags: <defaults>
</compile_context>

<pallas_src>
import functools

import jax
import jax.numpy as jnp
from jax.experimental import pallas as pl
from jax.experimental.pallas import tpu as pltpu


def actor_kernel(x_ref, w1_ref, b1_ref, w2_ref, b2_ref, wh_ref, bh_ref,
                 out_ref, *, action_dim):
    # fc layer 1: Linear(state_dim, 256) + ReLU
    # bf16 x bf16 operands -> MXU native path, f32 accumulation, f32 bias add.
    x = x_ref[...].astype(jnp.bfloat16)
    h1 = jnp.dot(x, w1_ref[...], preferred_element_type=jnp.float32) + b1_ref[...]
    h1 = jnp.maximum(h1, 0.0).astype(jnp.bfloat16)

    # fc layer 2: Linear(256, 256) + ReLU
    h2 = jnp.dot(h1, w2_ref[...], preferred_element_type=jnp.float32) + b2_ref[...]
    h2 = jnp.maximum(h2, 0.0).astype(jnp.bfloat16)

    # fused heads: one matmul producing [ mean | log_std | zero-pad ] along a
    # lane-dense 128-wide output.
    head = jnp.dot(h2, wh_ref[...], preferred_element_type=jnp.float32) + bh_ref[...]

    # std lanes: exp(clip(log_std, -20, 2)); mean lanes pass through untouched.
    # Padded lanes (>= 2*action_dim) are garbage-but-finite (exp(0)=1) and are
    # sliced off in the wrapper.
    std_all = jnp.exp(jnp.clip(head, -20.0, 2.0))
    lane = jax.lax.broadcasted_iota(jnp.int32, head.shape, dimension=1)
    out_ref[...] = jnp.where(lane < action_dim, head, std_all)


def actor_forward(state, params):
    """state: (B, state_dim) f32.  params: dict from init_actor_params.

    Returns (mean, std), each (B, action_dim) f32.
    """
    B, S = state.shape
    A = params["action_dim"]
    HW = params["bh"].shape[1]          # lane-dense head width (multiple of 128)

    # Batch tiling:
    #  * B < 256  -> single grid step, block == full array (no (8,128)
    #    constraint, no padding copy).
    #  * B >= 256 -> >= 2 grid steps (both TensorCores on v7x), tile capped at
    #    1024 rows (tiles this size are ~85% of HBM roofline; VMEM use is
    #    still only a few MiB).  Last block may be partial; Pallas masks it.
    if B < 256:
        bb, nb = B, 1
    else:
        bb = min(1024, ((pl.cdiv(B, 2) + 7) // 8) * 8)
        nb = pl.cdiv(B, bb)

    def resident(a):
        # Same block index every grid step -> weight stays VMEM-resident.
        return pl.BlockSpec(a.shape, lambda i: (0,) * a.ndim)

    # TODO(synk): for a true single-sample online-inference loop (B=1), keep
    # the ~150 KiB of weights VMEM-resident across *calls* via a
    # cross-pallas_call prefetch/future pattern (or batch requests) instead of
    # re-DMAing them every invocation.
    kernel = functools.partial(actor_kernel, action_dim=A)
    packed = pl.pallas_call(
        kernel,
        out_shape=jax.ShapeDtypeStruct((B, HW), jnp.float32),
        grid=(nb,),
        in_specs=[pl.BlockSpec((bb, S), lambda i: (i, 0)),
                  resident(params["w1"]), resident(params["b1"]),
                  resident(params["w2"]), resident(params["b2"]),
                  resident(params["wh"]), resident(params["bh"])],
        out_specs=pl.BlockSpec((bb, HW), lambda i: (i, 0)),
        compiler_params=pltpu.CompilerParams(
            dimension_semantics=("parallel",)),
    )(state, params["w1"], params["b1"], params["w2"], params["b2"],
      params["wh"], params["bh"])

    return packed[:, :A], packed[:, A:2 * A]


def init_actor_params(key, state_dim, action_dim, hidden=256):
    """PyTorch-style nn.Linear init (uniform +/- 1/sqrt(fan_in)).

    Weights stored pre-transposed (in, out) in bf16; biases f32 (1, out).
    The two heads are fused AND zero-padded to a 128-lane-dense slab:
      wh = [wm | ws | 0], bh = [bm | bs | 0].
    """
    def linear(key, fan_in, fan_out):
        kw, kb = jax.random.split(key)
        bound = 1.0 / jnp.sqrt(jnp.float32(fan_in))
        w = jax.random.uniform(kw, (fan_in, fan_out), jnp.float32, -bound, bound)
        b = jax.random.uniform(kb, (1, fan_out), jnp.float32, -bound, bound)
        return w, b

    k1, k2, k3, k4 = jax.random.split(key, 4)
    w1, b1 = linear(k1, state_dim, hidden)
    w2, b2 = linear(k2, hidden, hidden)
    wm, bm = linear(k3, hidden, action_dim)
    ws, bs = linear(k4, hidden, action_dim)

    hw = max(128, ((2 * action_dim + 127) // 128) * 128)
    wh = jnp.zeros((hidden, hw), jnp.float32)
    wh = wh.at[:, :action_dim].set(wm).at[:, action_dim:2 * action_dim].set(ws)
    bh = jnp.zeros((1, hw), jnp.float32)
    bh = bh.at[:, :action_dim].set(bm).at[:, action_dim:2 * action_dim].set(bs)

    return {"w1": w1.astype(jnp.bfloat16), "b1": b1,
            "w2": w2.astype(jnp.bfloat16), "b2": b2,
            "wh": wh.astype(jnp.bfloat16), "bh": bh,
            "action_dim": action_dim}


def actor_forward_ref(state, params):
    """Pure-JAX reference of Actor.forward using the same bf16-operand /
    f32-accumulate compute path as the kernel."""
    A = params["action_dim"]
    x = state.astype(jnp.bfloat16)
    h1 = jnp.maximum(
        jnp.dot(x, params["w1"], preferred_element_type=jnp.float32)
        + params["b1"], 0.0)
    h2 = jnp.maximum(
        jnp.dot(h1.astype(jnp.bfloat16), params["w2"],
                preferred_element_type=jnp.float32) + params["b2"], 0.0)
    head = jnp.dot(h2.astype(jnp.bfloat16), params["wh"],
                   preferred_element_type=jnp.float32) + params["bh"]
    mean = head[:, :A]
    log_std = jnp.clip(head[:, A:2 * A], -20.0, 2.0)
    return mean, jnp.exp(log_std)


if __name__ == "__main__":
    # TODO(synk): Actor.sample (Normal rsample / log_prob / tanh) is RNG-driven
    # glue; only the deterministic forward() hot path is implemented in-kernel.
    state_dim, action_dim = 32, 8
    key = jax.random.PRNGKey(0)
    k_param, k_s1, k_s2, k_s3 = jax.random.split(key, 4)
    params = init_actor_params(k_param, state_dim, action_dim)

    ok = True
    # small single-step batch, mid single-step batch, and a multi-step batch
    # whose last grid block is partial (exercises masked edge blocks).
    for batch, ks in ((8, k_s1), (200, k_s2), (333, k_s3)):
        state = jax.random.normal(ks, (batch, state_dim), jnp.float32)
        mean, std = actor_forward(state, params)
        jax.block_until_ready((mean, std))

        mean_ref, std_ref = actor_forward_ref(state, params)
        ok &= mean.shape == (batch, action_dim) and std.shape == (batch, action_dim)
        ok &= bool(jnp.allclose(mean, mean_ref, atol=5e-3, rtol=5e-3))
        ok &= bool(jnp.allclose(std, std_ref, atol=5e-3, rtol=5e-3))
        ok &= bool(jnp.all(std > 0.0))

    assert ok
    print("KERNEL_OK")
</pallas_src>

<mosaic_0001>
module attributes {stable_mosaic.version = 11 : i64} {
  func.func @actor_kernel(%arg0: i32, %arg1: memref<8x32xf32, #tpu.memory_space<vmem>>, %arg2: memref<32x256xbf16, #tpu.memory_space<vmem>>, %arg3: memref<1x256xf32, #tpu.memory_space<vmem>>, %arg4: memref<256x256xbf16, #tpu.memory_space<vmem>>, %arg5: memref<1x256xf32, #tpu.memory_space<vmem>>, %arg6: memref<256x128xbf16, #tpu.memory_space<vmem>>, %arg7: memref<1x128xf32, #tpu.memory_space<vmem>>, %arg8: memref<8x128xf32, #tpu.memory_space<vmem>>) attributes {dimension_semantics = [#tpu.dimension_semantics<parallel>], iteration_bounds = array<i64: 1>, scalar_prefetch = 0 : i64, scratch_operands = 0 : i64, tpu.core_type = #tpu.core_type<tc>, window_params = [{transform_indices = @transform_0, window_bounds = array<i64: 8, 32>}, {pipeline_mode = #tpu.pipeline_mode<synchronous>, transform_indices = @transform_1, window_bounds = array<i64: 32, 256>}, {pipeline_mode = #tpu.pipeline_mode<synchronous>, transform_indices = @transform_2, window_bounds = array<i64: 1, 256>}, {pipeline_mode = #tpu.pipeline_mode<synchronous>, transform_indices = @transform_3, window_bounds = array<i64: 256, 256>}, {pipeline_mode = #tpu.pipeline_mode<synchronous>, transform_indices = @transform_4, window_bounds = array<i64: 1, 256>}, {pipeline_mode = #tpu.pipeline_mode<synchronous>, transform_indices = @transform_5, window_bounds = array<i64: 256, 128>}, {pipeline_mode = #tpu.pipeline_mode<synchronous>, transform_indices = @transform_6, window_bounds = array<i64: 1, 128>}, {transform_indices = @transform_7, window_bounds = array<i64: 8, 128>}]} {
    %c0 = arith.constant 0 : index
    %c0_0 = arith.constant 0 : index
    %0 = vector.load %arg1[%c0, %c0_0] : memref<8x32xf32, #tpu.memory_space<vmem>>, vector<8x32xf32>
    %1 = arith.truncf %0 : vector<8x32xf32> to vector<8x32xbf16>
    %c0_1 = arith.constant 0 : index
    %c0_2 = arith.constant 0 : index
    %2 = vector.load %arg2[%c0_1, %c0_2] : memref<32x256xbf16, #tpu.memory_space<vmem>>, vector<32x256xbf16>
    %cst = arith.constant dense<0.000000e+00> : vector<8x256xf32>
    %3 = tpu.matmul %1, %2, %cst {dimension_numbers = #tpu.dot_dimension_numbers<[1], [0], [0], [1], [0, 0, 1, 1], [], []>} : vector<8x32xbf16>, vector<32x256xbf16>, vector<8x256xf32> -> vector<8x256xf32>
    %c0_3 = arith.constant 0 : index
    %c0_4 = arith.constant 0 : index
    %4 = vector.load %arg3[%c0_3, %c0_4] : memref<1x256xf32, #tpu.memory_space<vmem>>, vector<1x256xf32>
    %5 = vector.broadcast %4 : vector<1x256xf32> to vector<8x256xf32>
    %6 = arith.addf %3, %5 : vector<8x256xf32>
    %cst_5 = arith.constant 0.000000e+00 : f32
    %7 = vector.broadcast %cst_5 : f32 to vector<8x256xf32>
    %8 = arith.maximumf %6, %7 : vector<8x256xf32>
    %9 = arith.truncf %8 : vector<8x256xf32> to vector<8x256xbf16>
    %c0_6 = arith.constant 0 : index
    %c0_7 = arith.constant 0 : index
    %10 = vector.load %arg4[%c0_6, %c0_7] : memref<256x256xbf16, #tpu.memory_space<vmem>>, vector<256x256xbf16>
    %cst_8 = arith.constant dense<0.000000e+00> : vector<8x256xf32>
    %11 = tpu.matmul %9, %10, %cst_8 {dimension_numbers = #tpu.dot_dimension_numbers<[1], [0], [0], [1], [0, 0, 1, 1], [], []>} : vector<8x256xbf16>, vector<256x256xbf16>, vector<8x256xf32> -> vector<8x256xf32>
    %c0_9 = arith.constant 0 : index
    %c0_10 = arith.constant 0 : index
    %12 = vector.load %arg5[%c0_9, %c0_10] : memref<1x256xf32, #tpu.memory_space<vmem>>, vector<1x256xf32>
    %13 = vector.broadcast %12 : vector<1x256xf32> to vector<8x256xf32>
    %14 = arith.addf %11, %13 : vector<8x256xf32>
    %cst_11 = arith.constant 0.000000e+00 : f32
    %15 = vector.broadcast %cst_11 : f32 to vector<8x256xf32>
    %16 = arith.maximumf %14, %15 : vector<8x256xf32>
    %17 = arith.truncf %16 : vector<8x256xf32> to vector<8x256xbf16>
    %c0_12 = arith.constant 0 : index
    %c0_13 = arith.constant 0 : index
    %18 = vector.load %arg6[%c0_12, %c0_13] : memref<256x128xbf16, #tpu.memory_space<vmem>>, vector<256x128xbf16>
    %cst_14 = arith.constant dense<0.000000e+00> : vector<8x128xf32>
    %19 = tpu.matmul %17, %18, %cst_14 {dimension_numbers = #tpu.dot_dimension_numbers<[1], [0], [0], [1], [0, 0, 1, 1], [], []>} : vector<8x256xbf16>, vector<256x128xbf16>, vector<8x128xf32> -> vector<8x128xf32>
    %c0_15 = arith.constant 0 : index
    %c0_16 = arith.constant 0 : index
    %20 = vector.load %arg7[%c0_15, %c0_16] : memref<1x128xf32, #tpu.memory_space<vmem>>, vector<1x128xf32>
    %21 = vector.broadcast %20 : vector<1x128xf32> to vector<8x128xf32>
    %22 = arith.addf %19, %21 : vector<8x128xf32>
    %cst_17 = arith.constant -2.000000e+01 : f32
    %cst_18 = arith.constant 2.000000e+00 : f32
    %23 = vector.broadcast %cst_17 : f32 to vector<8x128xf32>
    %24 = arith.maximumf %23, %22 : vector<8x128xf32>
    %25 = vector.broadcast %cst_18 : f32 to vector<8x128xf32>
    %26 = arith.minimumf %25, %24 : vector<8x128xf32>
    %27 = math.exp %26 : vector<8x128xf32>
    %28 = tpu.iota {dimensions = array<i32: 1>} : vector<8x128xi32>
    %c8_i32 = arith.constant 8 : i32
    %29 = vector.broadcast %c8_i32 : i32 to vector<8x128xi32>
    %30 = arith.cmpi slt, %28, %29 : vector<8x128xi32>
    %31 = arith.select %30, %22, %27 : vector<8x128xi1>, vector<8x128xf32>
    %c0_19 = arith.constant 0 : index
    %c0_20 = arith.constant 0 : index
    %32 = vector.load %arg8[%c0_19, %c0_20] : memref<8x128xf32, #tpu.memory_space<vmem>>, vector<8x128xf32>
    tpu.vector_store %arg8[%c0_19, %c0_20], %31 {strides = array<i32>} : memref<8x128xf32, #tpu.memory_space<vmem>>, vector<8x128xf32>,
    return
  }
  func.func @transform_0(%arg0: i32) -> (i32, i32) {
    %c0_i32 = arith.constant 0 : i32
    %c0_i32_0 = arith.constant 0 : i32
    return %arg0, %c0_i32 : i32, i32
  }
  func.func @transform_1(%arg0: i32) -> (i32, i32) {
    %c0_i32 = arith.constant 0 : i32
    %c0_i32_0 = arith.constant 0 : i32
    %c0_i32_1 = arith.constant 0 : i32
    return %c0_i32, %c0_i32_0 : i32, i32
  }
  func.func @transform_2(%arg0: i32) -> (i32, i32) {
    %c0_i32 = arith.constant 0 : i32
    %c0_i32_0 = arith.constant 0 : i32
    %c0_i32_1 = arith.constant 0 : i32
    return %c0_i32, %c0_i32_0 : i32, i32
  }
  func.func @transform_3(%arg0: i32) -> (i32, i32) {
    %c0_i32 = arith.constant 0 : i32
    %c0_i32_0 = arith.constant 0 : i32
    %c0_i32_1 = arith.constant 0 : i32
    return %c0_i32, %c0_i32_0 : i32, i32
  }
  func.func @transform_4(%arg0: i32) -> (i32, i32) {
    %c0_i32 = arith.constant 0 : i32
    %c0_i32_0 = arith.constant 0 : i32
    %c0_i32_1 = arith.constant 0 : i32
    return %c0_i32, %c0_i32_0 : i32, i32
  }
  func.func @transform_5(%arg0: i32) -> (i32, i32) {
    %c0_i32 = arith.constant 0 : i32
    %c0_i32_0 = arith.constant 0 : i32
    %c0_i32_1 = arith.constant 0 : i32
    return %c0_i32, %c0_i32_0 : i32, i32
  }
  func.func @transform_6(%arg0: i32) -> (i32, i32) {
    %c0_i32 = arith.constant 0 : i32
    %c0_i32_0 = arith.constant 0 : i32
    %c0_i32_1 = arith.constant 0 : i32
    return %c0_i32, %c0_i32_0 : i32, i32
  }
  func.func @transform_7(%arg0: i32) -> (i32, i32) {
    %c0_i32 = arith.constant 0 : i32
    %c0_i32_0 = arith.constant 0 : i32
    return %arg0, %c0_i32 : i32, i32
  }
}

</mosaic_0001>

<llo_original>
// kernel: tpu_custom_call.1
$region0: #{tpu_custom_call.1}
  #allocation0 [shape = 'u32[]', space=smem, size = 0x4, offset = 0x4, fixed_abs, tag = 'smem constant byte address 0x4 - core index']
  #allocation1 [shape = 'u32[72,128]{1,0:T(1,128)}', space=vmem, size = 0x9000, scoped, tag = 'internal scratch']
  %s0 = inlined_call_operand.hbm [shape: f32[8,32], index: 0, kind: input, shape index: {}]
  %s1 = inlined_call_operand.hbm [shape: bf16[32,256], index: 1, kind: input, shape index: {}]
  %s2 = inlined_call_operand.hbm [shape: f32[1,256], index: 2, kind: input, shape index: {}]
  %s3 = inlined_call_operand.hbm [shape: bf16[256,256], index: 3, kind: input, shape index: {}]
  %s4 = inlined_call_operand.vmem [shape: f32[1,256], index: 4, kind: input, shape index: {}]
  %s5 = inlined_call_operand.hbm [shape: bf16[256,128], index: 5, kind: input, shape index: {}]
  %s6 = inlined_call_operand.vmem [shape: f32[1,128], index: 6, kind: input, shape index: {}]
  %s7 = inlined_call_operand.hbm [shape: f32[8,128], index: 7, kind: output, shape index: {}]
  %s8 = sld [smem:[#allocation0]]
  $region58: #{tpu_custom_call.1} parent=0
    _
  %s10 = ssub.s32 1, %s8
  %s11 = scalar_select 0, %s10, %s8
  $region1: #{tpu_custom_call.1} parent=0
    #allocation2 [shape = 'u8[4096]{0}', space=vmem, size = 0x1000, scoped, tag = 'input window, operand 0, single buffered']
    #allocation3 [shape = 's32[1]{0}', space=sflag, size = 0x4, scoped, tag = 'scoped memory for tpu_custom_call.1']
    #allocation4 [shape = 's32[1]{0}', space=sflag, size = 0x4, scoped, tag = 'scoped memory for tpu_custom_call.1']
    #allocation5 [shape = 'u8[16384]{0}', space=vmem, size = 0x4000, scoped, tag = 'input window, operand 1, single buffered']
    #allocation6 [shape = 's32[1]{0}', space=sflag, size = 0x4, scoped, tag = 'scoped memory for tpu_custom_call.1']
    #allocation7 [shape = 'u8[1024]{0}', space=vmem, size = 0x400, scoped, tag = 'input window, operand 2, single buffered']
    #allocation8 [shape = 'u8[131072]{0}', space=vmem, size = 0x20000, scoped, tag = 'input window, operand 3, single buffered']
    #allocation9 [shape = 's32[1]{0}', space=sflag, size = 0x4, scoped, tag = 'scoped memory for tpu_custom_call.1']
    #allocation10 [shape = 'u8[65536]{0}', space=vmem, size = 0x10000, scoped, tag = 'input window, operand 5, single buffered']
    #allocation11 [shape = 'u8[4096]{0}', space=vmem, size = 0x1000, scoped, tag = 'output window, operand 0, single buffered']
    %12 = vsyncpa [#allocation3], 0
    %13 = vsyncpa [#allocation6], 0
    %14 = vsyncpa [#allocation9], 0
    %15 = vsyncpa [#allocation4], 0
    // Predicated region
    $region2: #{tpu_custom_call.1} parent=1 // pred_check
      _
    $region3: #{tpu_custom_call.1} parent=1 // pred_check_branch
      %17 = sbr.rel (0) target = $region5
    $region4: #{tpu_custom_call.1} parent=1 // pred_region
      %19 = vsyncadd [#allocation3], 0
      %s21 = sshll.u32 %s0, 4
      %s22 = int_to_ptr.hbm [resolvable:$true] %s21
      %s23 = sshll.u32 [#allocation2], 4
      %s24 = int_to_ptr.vmem [resolvable:$true] %s23
      %26 = dma.hbm_to_vmem [thread:$0]  %s22, 128, %s24, [#allocation3]
    $region5: #{tpu_custom_call.1} parent=1 // pred_fallthru
      _
    // Predicated region
    $region6: #{tpu_custom_call.1} parent=1 // pred_check
      _
    $region7: #{tpu_custom_call.1} parent=1 // pred_check_branch
      %28 = sbr.rel (0) target = $region9
    $region8: #{tpu_custom_call.1} parent=1 // pred_region
      %30 = vsyncadd [#allocation6], 0
      %s31 = sshll.u32 %s1, 4
      %s32 = int_to_ptr.hbm [resolvable:$true] %s31
      %s33 = sshll.u32 [#allocation5], 4
      %s34 = int_to_ptr.vmem [resolvable:$true] %s33
      %39 = dma.hbm_to_vmem [thread:$0]  %s32, 512, %s34, [#allocation6], 128, 128, 8
    $region9: #{tpu_custom_call.1} parent=1 // pred_fallthru
      _
    // Predicated region
    $region10: #{tpu_custom_call.1} parent=1 // pred_check
      _
    $region11: #{tpu_custom_call.1} parent=1 // pred_check_branch
      %41 = sbr.rel (0) target = $region13
    $region12: #{tpu_custom_call.1} parent=1 // pred_region
      %43 = vsyncadd [#allocation6], 0
      %s45 = sshll.u32 %s2, 4
      %s46 = int_to_ptr.hbm [resolvable:$true] %s45
      %s47 = sshll.u32 [#allocation7], 4
      %s48 = int_to_ptr.vmem [resolvable:$true] %s47
      %50 = dma.hbm_to_vmem [thread:$0]  %s46, 32, %s48, [#allocation6]
    $region13: #{tpu_custom_call.1} parent=1 // pred_fallthru
      _
    // Predicated region
    $region14: #{tpu_custom_call.1} parent=1 // pred_check
      _
    $region15: #{tpu_custom_call.1} parent=1 // pred_check_branch
      %52 = sbr.rel (0) target = $region17
    $region16: #{tpu_custom_call.1} parent=1 // pred_region
      %54 = vsyncadd [#allocation9], 0
      %s55 = sshll.u32 %s3, 4
      %s56 = int_to_ptr.hbm [resolvable:$true] %s55
      %s57 = sshll.u32 [#allocation8], 4
      %s58 = int_to_ptr.vmem [resolvable:$true] %s57
      %63 = dma.hbm_to_vmem [thread:$0]  %s56, 4096, %s58, [#allocation9], 128, 128, 8
    $region17: #{tpu_custom_call.1} parent=1 // pred_fallthru
      _
    // Predicated region
    $region18: #{tpu_custom_call.1} parent=1 // pred_check
      _
    $region19: #{tpu_custom_call.1} parent=1 // pred_check_branch
      %65 = sbr.rel (0) target = $region21
    $region20: #{tpu_custom_call.1} parent=1 // pred_region
      _
    $region21: #{tpu_custom_call.1} parent=1 // pred_fallthru
      _
    // Predicated region
    $region22: #{tpu_custom_call.1} parent=1 // pred_check
      _
    $region23: #{tpu_custom_call.1} parent=1 // pred_check_branch
      %67 = sbr.rel (0) target = $region25
    $region24: #{tpu_custom_call.1} parent=1 // pred_region
      %69 = vsyncadd [#allocation9], 0
      %s70 = sshll.u32 %s5, 4
      %s71 = int_to_ptr.hbm [resolvable:$true] %s70
      %s72 = sshll.u32 [#allocation10], 4
      %s73 = int_to_ptr.vmem [resolvable:$true] %s72
      %78 = dma.hbm_to_vmem [thread:$0]  %s71, 2048, %s73, [#allocation9], 64, 64, 4
    $region25: #{tpu_custom_call.1} parent=1 // pred_fallthru
      _
    // Predicated region
    $region26: #{tpu_custom_call.1} parent=1 // pred_check
      _
    $region27: #{tpu_custom_call.1} parent=1 // pred_check_branch
      %80 = sbr.rel (0) target = $region29
    $region28: #{tpu_custom_call.1} parent=1 // pred_region
      _
    $region29: #{tpu_custom_call.1} parent=1 // pred_fallthru
      _
    // Predicated region
    $region30: #{tpu_custom_call.1} parent=1 // pred_check
      _
    $region31: #{tpu_custom_call.1} parent=1 // pred_check_branch
      %82 = sbr.rel (0) target = $region33
    $region32: #{tpu_custom_call.1} parent=1 // pred_region
      %84 = dma.done [#allocation3], 128
    $region33: #{tpu_custom_call.1} parent=1 // pred_fallthru
      _
    // Predicated region
    $region34: #{tpu_custom_call.1} parent=1 // pred_check
      _
    $region35: #{tpu_custom_call.1} parent=1 // pred_check_branch
      %86 = sbr.rel (0) target = $region37
    $region36: #{tpu_custom_call.1} parent=1 // pred_region
      %88 = dma.done [#allocation6], 512
    $region37: #{tpu_custom_call.1} parent=1 // pred_fallthru
      _
    // Predicated region
    $region38: #{tpu_custom_call.1} parent=1 // pred_check
      _
    $region39: #{tpu_custom_call.1} parent=1 // pred_check_branch
      %90 = sbr.rel (0) target = $region41
    $region40: #{tpu_custom_call.1} parent=1 // pred_region
      %92 = dma.done [#allocation6], 32
    $region41: #{tpu_custom_call.1} parent=1 // pred_fallthru
      _
    // Predicated region
    $region42: #{tpu_custom_call.1} parent=1 // pred_check
      _
    $region43: #{tpu_custom_call.1} parent=1 // pred_check_branch
      %94 = sbr.rel (0) target = $region45
    $region44: #{tpu_custom_call.1} parent=1 // pred_region
      %96 = dma.done [#allocation9], 4096
    $region45: #{tpu_custom_call.1} parent=1 // pred_fallthru
      _
    // Predicated region
    $region46: #{tpu_custom_call.1} parent=1 // pred_check
      _
    $region47: #{tpu_custom_call.1} parent=1 // pred_check_branch
      %98 = sbr.rel (0) target = $region49
    $region48: #{tpu_custom_call.1} parent=1 // pred_region
      %100 = dma.done [#allocation9], 2048
    $region49: #{tpu_custom_call.1} parent=1 // pred_fallthru
      _
    %v102 = vld [vmem:[#allocation2] sm:$0xff]
    %v103 = vpack.c.bf16 %v102, %v102
    %v104 = vld [vmem:[#allocation5] sm:$0xff]
    %v105 = vld [vmem:[#allocation5 + $0x8] sm:$0xff]
    %v106 = vld [vmem:[#allocation5 + $0x10] sm:$0xff]
    %v107 = vld [vmem:[#allocation5 + $0x18] sm:$0xff]
    %v108 = vld [vmem:[#allocation7] sm:$0x3]
    %v110 = vperm.slane %v108, 0
    %v111 = vperm.slane %v108, 1
    %v118 = vunpack.c.l.b16 %v104
    %v119 = vunpack.c.h.b16 %v104
    %v120 = vunpack.c.l.b16 %v105
    %v121 = vunpack.c.h.b16 %v105
    %v122 = vunpack.c.l.b16 %v106
    %v123 = vunpack.c.h.b16 %v106
    %v124 = vunpack.c.l.b16 %v107
    %v125 = vunpack.c.h.b16 %v107
    %v126 = vpack.c.b16 %v120, %v118
    %v127 = vpack.c.b16 %v121, %v119
    %v128 = vpack.c.b16 %v124, %v122
    %v129 = vpack.c.b16 %v125, %v123
    %vm134 = vcmask 261120
    %v136 = vsel %vm134, %v103, 0
    %138 = vmatpush.bf16.msra.mxu0 0
    %139 = vmatpush.bf16.msra.mxu0 0
    %140 = vmatpush.bf16.msra.mxu0 0
    %141 = vmatpush.bf16.msra.mxu0 0
    %142 = vmatpush.bf16.msra.mxu0 0
    %143 = vmatpush.bf16.msra.mxu0 0
    %144 = vmatpush.bf16.msra.mxu0 %v128
    %145 = vmatpush.bf16.msra.mxu0 %v126
    %146 = vmatmul.bf16.gmra.mxu0 %v136
    %v147 = vpop.f32.mrf.mxu0
    %v148 = vadd.f32 %v110, %v147
    %v149 = vpop.f32.mrf.mxu0
    %150 = vdwg.mxu0
    %151 = vmatpush.bf16.msra.mxu0 0
    %152 = vmatpush.bf16.msra.mxu0 0
    %153 = vmatpush.bf16.msra.mxu0 0
    %154 = vmatpush.bf16.msra.mxu0 0
    %155 = vmatpush.bf16.msra.mxu0 0
    %156 = vmatpush.bf16.msra.mxu0 0
    %157 = vmatpush.bf16.msra.mxu0 %v129
    %158 = vmatpush.bf16.msra.mxu0 %v127
    %159 = vmatmul.bf16.gmra.mxu0 %v136
    %v160 = vpop.f32.mrf.mxu0
    %v161 = vadd.f32 %v111, %v160
    %v162 = vpop.f32.mrf.mxu0
    %163 = vdwg.mxu0
    %v164 = vmax.f32 %v148, 0.0
    %v165 = vmax.f32 %v161, 0.0
    %v166 = vpack.c.bf16 %v164, %v164
    %v167 = vpack.c.bf16 %v165, %v165
    %v168 = vld [vmem:[#allocation8] sm:$0xff]
    %v169 = vld [vmem:[#allocation8 + $0x8] sm:$0xff]
    %v170 = vld [vmem:[#allocation8 + $0x10] sm:$0xff]
    %v171 = vld [vmem:[#allocation8 + $0x18] sm:$0xff]
    %v172 = vld [vmem:[#allocation8 + $0x20] sm:$0xff]
    %v173 = vld [vmem:[#allocation8 + $0x28] sm:$0xff]
    %v174 = vld [vmem:[#allocation8 + $0x30] sm:$0xff]
    %v175 = vld [vmem:[#allocation8 + $0x38] sm:$0xff]
    %v176 = vld [vmem:[#allocation8 + $0x40] sm:$0xff]
    %v177 = vld [vmem:[#allocation8 + $0x48] sm:$0xff]
    %v178 = vld [vmem:[#allocation8 + $0x50] sm:$0xff]
    %v179 = vld [vmem:[#allocation8 + $0x58] sm:$0xff]
    %v180 = vld [vmem:[#allocation8 + $0x60] sm:$0xff]
    %v181 = vld [vmem:[#allocation8 + $0x68] sm:$0xff]
    %v182 = vld [vmem:[#allocation8 + $0x70] sm:$0xff]
    %v183 = vld [vmem:[#allocation8 + $0x78] sm:$0xff]
    %v184 = vld [vmem:[#allocation8 + $0x80] sm:$0xff]
    %v185 = vld [vmem:[#allocation8 + $0x88] sm:$0xff]
    %v186 = vld [vmem:[#allocation8 + $0x90] sm:$0xff]
    %v187 = vld [vmem:[#allocation8 + $0x98] sm:$0xff]
    %v188 = vld [vmem:[#allocation8 + $0xa0] sm:$0xff]
    %v189 = vld [vmem:[#allocation8 + $0xa8] sm:$0xff]
    %v190 = vld [vmem:[#allocation8 + $0xb0] sm:$0xff]
    %v191 = vld [vmem:[#allocation8 + $0xb8] sm:$0xff]
    %v192 = vld [vmem:[#allocation8 + $0xc0] sm:$0xff]
    %v193 = vld [vmem:[#allocation8 + $0xc8] sm:$0xff]
    %v194 = vld [vmem:[#allocation8 + $0xd0] sm:$0xff]
    %v195 = vld [vmem:[#allocation8 + $0xd8] sm:$0xff]
    %v196 = vld [vmem:[#allocation8 + $0xe0] sm:$0xff]
    %v197 = vld [vmem:[#allocation8 + $0xe8] sm:$0xff]
    %v198 = vld [vmem:[#allocation8 + $0xf0] sm:$0xff]
    %v199 = vld [vmem:[#allocation8 + $0xf8] sm:$0xff]
    %v200 = vld [vmem:[%s4] sm:$0x3]
    %v202 = vperm.slane %v200, 0
    %v203 = vperm.slane %v200, 1
    %v238 = vunpack.c.l.b16 %v168
    %v239 = vunpack.c.h.b16 %v168
    %v240 = vunpack.c.l.b16 %v169
    %v241 = vunpack.c.h.b16 %v169
    %v242 = vunpack.c.l.b16 %v170
    %v243 = vunpack.c.h.b16 %v170
    %v244 = vunpack.c.l.b16 %v171
    %v245 = vunpack.c.h.b16 %v171
    %v246 = vunpack.c.l.b16 %v172
    %v247 = vunpack.c.h.b16 %v172
    %v248 = vunpack.c.l.b16 %v173
    %v249 = vunpack.c.h.b16 %v173
    %v250 = vunpack.c.l.b16 %v174
    %v251 = vunpack.c.h.b16 %v174
    %v252 = vunpack.c.l.b16 %v175
    %v253 = vunpack.c.h.b16 %v175
    %v254 = vunpack.c.l.b16 %v176
    %v255 = vunpack.c.h.b16 %v176
    %v256 = vunpack.c.l.b16 %v177
    %v257 = vunpack.c.h.b16 %v177
    %v258 = vunpack.c.l.b16 %v178
    %v259 = vunpack.c.h.b16 %v178
    %v260 = vunpack.c.l.b16 %v179
    %v261 = vunpack.c.h.b16 %v179
    %v262 = vunpack.c.l.b16 %v180
    %v263 = vunpack.c.h.b16 %v180
    %v264 = vunpack.c.l.b16 %v181
    %v265 = vunpack.c.h.b16 %v181
    %v266 = vunpack.c.l.b16 %v182
    %v267 = vunpack.c.h.b16 %v182
    %v268 = vunpack.c.l.b16 %v183
    %v269 = vunpack.c.h.b16 %v183
    %v270 = vunpack.c.l.b16 %v184
    %v271 = vunpack.c.h.b16 %v184
    %v272 = vunpack.c.l.b16 %v185
    %v273 = vunpack.c.h.b16 %v185
    %v274 = vunpack.c.l.b16 %v186
    %v275 = vunpack.c.h.b16 %v186
    %v276 = vunpack.c.l.b16 %v187
    %v277 = vunpack.c.h.b16 %v187
    %v278 = vunpack.c.l.b16 %v188
    %v279 = vunpack.c.h.b16 %v188
    %v280 = vunpack.c.l.b16 %v189
    %v281 = vunpack.c.h.b16 %v189
    %v282 = vunpack.c.l.b16 %v190
    %v283 = vunpack.c.h.b16 %v190
    %v284 = vunpack.c.l.b16 %v191
    %v285 = vunpack.c.h.b16 %v191
    %v286 = vunpack.c.l.b16 %v192
    %v287 = vunpack.c.h.b16 %v192
    %v288 = vunpack.c.l.b16 %v193
    %v289 = vunpack.c.h.b16 %v193
    %v290 = vunpack.c.l.b16 %v194
    %v291 = vunpack.c.h.b16 %v194
    %v292 = vunpack.c.l.b16 %v195
    %v293 = vunpack.c.h.b16 %v195
    %v294 = vunpack.c.l.b16 %v196
    %v295 = vunpack.c.h.b16 %v196
    %v296 = vunpack.c.l.b16 %v197
    %v297 = vunpack.c.h.b16 %v197
    %v298 = vunpack.c.l.b16 %v198
    %v299 = vunpack.c.h.b16 %v198
    %v300 = vunpack.c.l.b16 %v199
    %v301 = vunpack.c.h.b16 %v199
    %v302 = vpack.c.b16 %v240, %v238
    %v303 = vpack.c.b16 %v241, %v239
    %v304 = vpack.c.b16 %v244, %v242
    %v305 = vpack.c.b16 %v245, %v243
    %v306 = vpack.c.b16 %v248, %v246
    %v307 = vpack.c.b16 %v249, %v247
    %v308 = vpack.c.b16 %v252, %v250
    %v309 = vpack.c.b16 %v253, %v251
    %v310 = vpack.c.b16 %v256, %v254
    %v311 = vpack.c.b16 %v257, %v255
    %v312 = vpack.c.b16 %v260, %v258
    %v313 = vpack.c.b16 %v261, %v259
    %v314 = vpack.c.b16 %v264, %v262
    %v315 = vpack.c.b16 %v265, %v263
    %v316 = vpack.c.b16 %v268, %v266
    %v317 = vpack.c.b16 %v269, %v267
    %v318 = vpack.c.b16 %v272, %v270
    %v319 = vpack.c.b16 %v273, %v271
    %v320 = vpack.c.b16 %v276, %v274
    %v321 = vpack.c.b16 %v277, %v275
    %v322 = vpack.c.b16 %v280, %v278
    %v323 = vpack.c.b16 %v281, %v279
    %v324 = vpack.c.b16 %v284, %v282
    %v325 = vpack.c.b16 %v285, %v283
    %v326 = vpack.c.b16 %v288, %v286
    %v327 = vpack.c.b16 %v289, %v287
    %v328 = vpack.c.b16 %v292, %v290
    %v329 = vpack.c.b16 %v293, %v291
    %v330 = vpack.c.b16 %v296, %v294
    %v331 = vpack.c.b16 %v297, %v295
    %v332 = vpack.c.b16 %v300, %v298
    %v333 = vpack.c.b16 %v301, %v299
    %366 = vmatpush.bf16.msra.mxu0 %v316
    %367 = vmatpush.bf16.msra.mxu0 %v314
    %368 = vmatpush.bf16.msra.mxu0 %v312
    %369 = vmatpush.bf16.msra.mxu0 %v310
    %370 = vmatpush.bf16.msra.mxu0 %v308
    %371 = vmatpush.bf16.msra.mxu0 %v306
    %372 = vmatpush.bf16.msra.mxu0 %v304
    %373 = vmatpush.bf16.msra.mxu0 %v302
    %374 = vmatmul.bf16.gmra.mxu0 %v166
    %v375 = vpop.f32.mrf.mxu0
    %v376 = vadd.f32 %v202, %v375
    %v377 = vpop.f32.mrf.mxu0
    %378 = vdwg.mxu0
    %379 = vmatpush.bf16.msra.mxu0 %v332
    %380 = vmatpush.bf16.msra.mxu0 %v330
    %381 = vmatpush.bf16.msra.mxu0 %v328
    %382 = vmatpush.bf16.msra.mxu0 %v326
    %383 = vmatpush.bf16.msra.mxu0 %v324
    %384 = vmatpush.bf16.msra.mxu0 %v322
    %385 = vmatpush.bf16.msra.mxu0 %v320
    %386 = vmatpush.bf16.msra.mxu0 %v318
    %387 = vmatmul.bf16.gmra.mxu0 %v167
    %v388 = vpop.f32.mrf.mxu0
    %v389 = vadd.f32 %v376, %v388
    %v390 = vpop.f32.mrf.mxu0
    %391 = vdwg.mxu0
    %392 = vmatpush.bf16.msra.mxu0 %v317
    %393 = vmatpush.bf16.msra.mxu0 %v315
    %394 = vmatpush.bf16.msra.mxu0 %v313
    %395 = vmatpush.bf16.msra.mxu0 %v311
    %396 = vmatpush.bf16.msra.mxu0 %v309
    %397 = vmatpush.bf16.msra.mxu0 %v307
    %398 = vmatpush.bf16.msra.mxu0 %v305
    %399 = vmatpush.bf16.msra.mxu0 %v303
    %400 = vmatmul.bf16.gmra.mxu0 %v166
    %v401 = vpop.f32.mrf.mxu0
    %v402 = vadd.f32 %v203, %v401
    %v403 = vpop.f32.mrf.mxu0
    %404 = vdwg.mxu0
    %405 = vmatpush.bf16.msra.mxu0 %v333
    %406 = vmatpush.bf16.msra.mxu0 %v331
    %407 = vmatpush.bf16.msra.mxu0 %v329
    %408 = vmatpush.bf16.msra.mxu0 %v327
    %409 = vmatpush.bf16.msra.mxu0 %v325
    %410 = vmatpush.bf16.msra.mxu0 %v323
    %411 = vmatpush.bf16.msra.mxu0 %v321
    %412 = vmatpush.bf16.msra.mxu0 %v319
    %413 = vmatmul.bf16.gmra.mxu0 %v167
    %v414 = vpop.f32.mrf.mxu0
    %v415 = vadd.f32 %v402, %v414
    %v416 = vpop.f32.mrf.mxu0
    %417 = vdwg.mxu0
    %v418 = vmax.f32 %v389, 0.0
    %v419 = vmax.f32 %v415, 0.0
    %v420 = vpack.c.bf16 %v418, %v418
    %v421 = vpack.c.bf16 %v419, %v419
    %v422 = vld [vmem:[#allocation10] sm:$0xf]
    %v423 = vld [vmem:[#allocation10 + $0x4] sm:$0xf]
    %v424 = vld [vmem:[#allocation10 + $0x8] sm:$0xf]
    %v425 = vld [vmem:[#allocation10 + $0xc] sm:$0xf]
    %v426 = vld [vmem:[#allocation10 + $0x10] sm:$0xf]
    %v427 = vld [vmem:[#allocation10 + $0x14] sm:$0xf]
    %v428 = vld [vmem:[#allocation10 + $0x18] sm:$0xf]
    %v429 = vld [vmem:[#allocation10 + $0x1c] sm:$0xf]
    %v430 = vld [vmem:[#allocation10 + $0x20] sm:$0xf]
    %v431 = vld [vmem:[#allocation10 + $0x24] sm:$0xf]
    %v432 = vld [vmem:[#allocation10 + $0x28] sm:$0xf]
    %v433 = vld [vmem:[#allocation10 + $0x2c] sm:$0xf]
    %v434 = vld [vmem:[#allocation10 + $0x30] sm:$0xf]
    %v435 = vld [vmem:[#allocation10 + $0x34] sm:$0xf]
    %v436 = vld [vmem:[#allocation10 + $0x38] sm:$0xf]
    %v437 = vld [vmem:[#allocation10 + $0x3c] sm:$0xf]
    %v438 = vld [vmem:[#allocation10 + $0x40] sm:$0xf]
    %v439 = vld [vmem:[#allocation10 + $0x44] sm:$0xf]
    %v440 = vld [vmem:[#allocation10 + $0x48] sm:$0xf]
    %v441 = vld [vmem:[#allocation10 + $0x4c] sm:$0xf]
    %v442 = vld [vmem:[#allocation10 + $0x50] sm:$0xf]
    %v443 = vld [vmem:[#allocation10 + $0x54] sm:$0xf]
    %v444 = vld [vmem:[#allocation10 + $0x58] sm:$0xf]
    %v445 = vld [vmem:[#allocation10 + $0x5c] sm:$0xf]
    %v446 = vld [vmem:[#allocation10 + $0x60] sm:$0xf]
    %v447 = vld [vmem:[#allocation10 + $0x64] sm:$0xf]
    %v448 = vld [vmem:[#allocation10 + $0x68] sm:$0xf]
    %v449 = vld [vmem:[#allocation10 + $0x6c] sm:$0xf]
    %v450 = vld [vmem:[#allocation10 + $0x70] sm:$0xf]
    %v451 = vld [vmem:[#allocation10 + $0x74] sm:$0xf]
    %v452 = vld [vmem:[#allocation10 + $0x78] sm:$0xf]
    %v453 = vld [vmem:[#allocation10 + $0x7c] sm:$0xf]
    %v454 = vld [vmem:[%s6] sm:$0x1]
    %v456 = vperm.slane %v454, 0
    %v490 = vunpack.c.l.b16 %v422
    %v491 = vunpack.c.l.b16 %v423
    %v492 = vunpack.c.l.b16 %v424
    %v493 = vunpack.c.l.b16 %v425
    %v494 = vunpack.c.l.b16 %v426
    %v495 = vunpack.c.l.b16 %v427
    %v496 = vunpack.c.l.b16 %v428
    %v497 = vunpack.c.l.b16 %v429
    %v498 = vunpack.c.l.b16 %v430
    %v499 = vunpack.c.l.b16 %v431
    %v500 = vunpack.c.l.b16 %v432
    %v501 = vunpack.c.l.b16 %v433
    %v502 = vunpack.c.l.b16 %v434
    %v503 = vunpack.c.l.b16 %v435
    %v504 = vunpack.c.l.b16 %v436
    %v505 = vunpack.c.l.b16 %v437
    %v506 = vunpack.c.l.b16 %v438
    %v507 = vunpack.c.l.b16 %v439
    %v508 = vunpack.c.l.b16 %v440
    %v509 = vunpack.c.l.b16 %v441
    %v510 = vunpack.c.l.b16 %v442
    %v511 = vunpack.c.l.b16 %v443
    %v512 = vunpack.c.l.b16 %v444
    %v513 = vunpack.c.l.b16 %v445
    %v514 = vunpack.c.l.b16 %v446
    %v515 = vunpack.c.l.b16 %v447
    %v516 = vunpack.c.l.b16 %v448
    %v517 = vunpack.c.l.b16 %v449
    %v518 = vunpack.c.l.b16 %v450
    %v519 = vunpack.c.l.b16 %v451
    %v520 = vunpack.c.l.b16 %v452
    %v521 = vunpack.c.l.b16 %v453
    %v522 = vpack.c.b16 %v491, %v490
    %v523 = vpack.c.b16 %v493, %v492
    %v524 = vpack.c.b16 %v495, %v494
    %v525 = vpack.c.b16 %v497, %v496
    %v526 = vpack.c.b16 %v499, %v498
    %v527 = vpack.c.b16 %v501, %v500
    %v528 = vpack.c.b16 %v503, %v502
    %v529 = vpack.c.b16 %v505, %v504
    %v530 = vpack.c.b16 %v507, %v506
    %v531 = vpack.c.b16 %v509, %v508
    %v532 = vpack.c.b16 %v511, %v510
    %v533 = vpack.c.b16 %v513, %v512
    %v534 = vpack.c.b16 %v515, %v514
    %v535 = vpack.c.b16 %v517, %v516
    %v536 = vpack.c.b16 %v519, %v518
    %v537 = vpack.c.b16 %v521, %v520
    %554 = vmatpush.bf16.msra.mxu0 %v529
    %555 = vmatpush.bf16.msra.mxu0 %v528
    %556 = vmatpush.bf16.msra.mxu0 %v527
    %557 = vmatpush.bf16.msra.mxu0 %v526
    %558 = vmatpush.bf16.msra.mxu0 %v525
    %559 = vmatpush.bf16.msra.mxu0 %v524
    %560 = vmatpush.bf16.msra.mxu0 %v523
    %561 = vmatpush.bf16.msra.mxu0 %v522
    %562 = vmatmul.bf16.gmra.mxu0 %v420
    %v563 = vpop.f32.mrf.mxu0
    %v564 = vadd.f32 %v456, %v563
    %v565 = vpop.f32.mrf.mxu0
    %566 = vdwg.mxu0
    %567 = vmatpush.bf16.msra.mxu0 %v537
    %568 = vmatpush.bf16.msra.mxu0 %v536
    %569 = vmatpush.bf16.msra.mxu0 %v535
    %570 = vmatpush.bf16.msra.mxu0 %v534
    %571 = vmatpush.bf16.msra.mxu0 %v533
    %572 = vmatpush.bf16.msra.mxu0 %v532
    %573 = vmatpush.bf16.msra.mxu0 %v531
    %574 = vmatpush.bf16.msra.mxu0 %v530
    %575 = vmatmul.bf16.gmra.mxu0 %v421
    %v576 = vpop.f32.mrf.mxu0
    %v577 = vadd.f32 %v564, %v576
    %v578 = vpop.f32.mrf.mxu0
    %579 = vdwg.mxu0
    %v580 = vmax.f32 %v577, -20.0
    %v581 = vmin.f32 %v580, 2.0
    %v582 = vmul.f32 %v581, 1.442695
    %v583 = vpow.pop %v582
    %v584 = vlaneseq
    %v585 = vand.u32 %v584, 127
    %vm586 = vcmp.lt.s32.totalorder %v585, 8
    %v587 = vsel %vm586, %v577, %v583
    %588 = vst [vmem:[#allocation11] sm:$0xff] %v587
    // Predicated region
    $region50: #{tpu_custom_call.1} parent=1 // pred_check
      _
    $region51: #{tpu_custom_call.1} parent=1 // pred_check_branch
      %590 = sbr.rel (0) target = $region53
    $region52: #{tpu_custom_call.1} parent=1 // pred_region
      %592 = vsyncadd [#allocation4], 0
      %s594 = sshll.u32 [#allocation11], 4
      %s595 = int_to_ptr.vmem [resolvable:$true] %s594
      %s596 = sshll.u32 %s7, 4
      %s597 = int_to_ptr.hbm [resolvable:$true] %s596
      %599 = dma.vmem_to_hbm [thread:$0]  %s595, 128, %s597, [#allocation4]
    $region53: #{tpu_custom_call.1} parent=1 // pred_fallthru
      _
    // Predicated region
    $region54: #{tpu_custom_call.1} parent=1 // pred_check
      _
    $region55: #{tpu_custom_call.1} parent=1 // pred_check_branch
      %601 = sbr.rel (0) target = $region57
    $region56: #{tpu_custom_call.1} parent=1 // pred_region
      %603 = dma.done [#allocation4], 128
    $region57: #{tpu_custom_call.1} parent=1 // pred_fallthru
      _
    %604 = vsyncpa [#allocation3], 1
    %605 = vsyncpa [#allocation6], 1
    %606 = vsyncpa [#allocation9], 1
    %607 = vsyncpa [#allocation4], 1

</llo_original>
